<compile_context>
chip_gen: v7x
topology: tpu7x:2x2x1
jax: 0.10.0
libtpu: 0.0.40
codegen_flags: <defaults>
</compile_context>

<pallas_src>
import math
import numpy as np
import jax
import jax.numpy as jnp
from jax.experimental import pallas as pl
from jax.experimental.pallas import tpu as pltpu

CONV_MID = (8, 16)
FC_MID = 64
BN_EPS = 1e-5
MAX_TILE_S = 8192            # spatial columns of the patch matrix processed per grid step


def _round_up(n, m):
    return ((n + m - 1) // m) * m


# ----------------------------------------------------------------------------
# Pallas kernel: conv1+bn1+relu -> conv2(1x1)+bn2+relu -> spatial SUM, fully fused
# ----------------------------------------------------------------------------
def fused_conv_pool_sum(patches, w1, sh1, w2, sh2, *, tile_s, s_split):
    """patches: (B, K, S_pad) bf16, K = Cin*27, spatial on lanes (lane-dense).
    w1: (C1, K) bf16 with BN1 scale folded, sh1: (C1, 1) f32 folded shift.
    w2: (C2, C1) bf16 with BN2 scale folded, sh2: (C2, 1) f32 folded shift.
    Returns per-(batch, split) partial column sums, shape (B, s_split, C2, 1) f32.
    Padded (all-zero) columns are NOT masked; the caller removes their constant
    contribution analytically.
    """
    B, K, S_pad = patches.shape
    C1 = w1.shape[0]
    C2 = w2.shape[0]
    n_s = S_pad // (tile_s * s_split)

    def kernel(p_ref, w1_ref, sh1_ref, w2_ref, sh2_ref, o_ref):
        @pl.when(pl.program_id(2) == 0)
        def _():
            o_ref[...] = jnp.zeros_like(o_ref)

        a = p_ref[...]                                                # (K, tile_s) bf16
        # conv1 (+ folded bn1 scale) on the MXU (bf16, f32 accumulate); +shift, relu.
        h1 = jnp.dot(w1_ref[...], a, preferred_element_type=jnp.float32)
        h1 = jnp.maximum(h1 + sh1_ref[...], 0.0)                      # (C1, tile_s)
        # conv2 is 1x1 -> pointwise matmul; bf16 feed keeps it a single MXU pass.
        h2 = jnp.dot(w2_ref[...], h1.astype(jnp.bfloat16),
                     preferred_element_type=jnp.float32)
        h2 = jnp.maximum(h2 + sh2_ref[...], 0.0)                      # (C2, tile_s)
        # Adaptive-avg-pool accumulation: lane-axis sum (XLU) into the resident acc.
        o_ref[...] += jnp.sum(h2, axis=1, keepdims=True)              # (C2, 1)

    return pl.pallas_call(
        kernel,
        out_shape=jax.ShapeDtypeStruct((B, s_split, C2, 1), jnp.float32),
        grid=(B, s_split, n_s),
        in_specs=[
            # Streaming operand: one (K, tile_s) slab per step, double-buffered by Pallas.
            pl.BlockSpec((None, K, tile_s), lambda b, p, s: (b, 0, p * n_s + s)),
            # Resident (constant block index) operands.
            pl.BlockSpec((C1, K), lambda b, p, s: (0, 0)),
            pl.BlockSpec((C1, 1), lambda b, p, s: (0, 0)),
            pl.BlockSpec((C2, C1), lambda b, p, s: (0, 0)),
            pl.BlockSpec((C2, 1), lambda b, p, s: (0, 0)),
        ],
        # Accumulator: constant across the reduction axis -> stays VMEM-resident.
        out_specs=pl.BlockSpec((None, None, C2, 1), lambda b, p, s: (b, p, 0, 0)),
        compiler_params=pltpu.CompilerParams(
            # batch and S-split axes feed the megacore; reduction axis is arbitrary.
            dimension_semantics=("parallel", "parallel", "arbitrary"),
            vmem_limit_bytes=32 * 1024 * 1024,
        ),
    )(patches, w1, sh1, w2, sh2)


# ----------------------------------------------------------------------------
# Plain-JAX glue: im2col patch extraction, BN folding, parameter init
# ----------------------------------------------------------------------------
def im2col_3d(x, k, stride, pad):
    """x: (B, C, D, H, W) -> patches (B, C*k^3, Do*Ho*Wo).
    Sublane (row) order is (c, kd, kh, kw); spatial sits on the lane axis.
    This is the natural stack/reshape order, so no large transpose is emitted."""
    # TODO(synk): for very large volumes build patches inside the kernel from a haloed
    # input window instead of materializing this (bf16, ~0.4x-of-input) array in XLA.
    B, C, D, H, W = x.shape
    xp = jnp.pad(x, ((0, 0), (0, 0), (pad, pad), (pad, pad), (pad, pad)))
    Do = (D + 2 * pad - k) // stride + 1
    Ho = (H + 2 * pad - k) // stride + 1
    Wo = (W + 2 * pad - k) // stride + 1
    cols = []
    for kd in range(k):
        for kh in range(k):
            for kw in range(k):
                cols.append(xp[:, :,
                               kd:kd + stride * (Do - 1) + 1:stride,
                               kh:kh + stride * (Ho - 1) + 1:stride,
                               kw:kw + stride * (Wo - 1) + 1:stride])  # (B, C, Do, Ho, Wo)
    patches = jnp.stack(cols, axis=2)                                  # (B, C, k^3, Do, Ho, Wo)
    return patches.reshape(B, C * k ** 3, Do * Ho * Wo), (Do, Ho, Wo)


def bn_affine(bn):
    scale = bn["gamma"] / jnp.sqrt(bn["var"] + BN_EPS)
    shift = bn["beta"] - bn["mean"] * scale
    return scale, shift


def init_params(key, input_channel, state_dim):
    c1, c2 = CONV_MID
    ks = jax.random.split(key, 5)

    def kaiming_fan_out(k_, shape, fan_out):
        return jax.random.normal(k_, shape, jnp.float32) * math.sqrt(2.0 / fan_out)

    def xavier(k_, fan_in, fan_out):
        bound = math.sqrt(6.0 / (fan_in + fan_out))
        return jax.random.uniform(k_, (fan_in, fan_out), jnp.float32, -bound, bound)

    def bn_init(c):
        return {"gamma": jnp.ones((c,), jnp.float32), "beta": jnp.zeros((c,), jnp.float32),
                "mean": jnp.zeros((c,), jnp.float32), "var": jnp.ones((c,), jnp.float32)}

    return {
        "conv1_w": kaiming_fan_out(ks[0], (c1, input_channel, 3, 3, 3), c1 * 27),
        "conv1_b": jnp.zeros((c1,), jnp.float32),
        "bn1": bn_init(c1),
        "conv2_w": kaiming_fan_out(ks[1], (c2, c1, 1, 1, 1), c2 * 1),
        "conv2_b": jnp.zeros((c2,), jnp.float32),
        "bn2": bn_init(c2),
        "fc1_w": xavier(ks[2], state_dim, FC_MID), "fc1_b": jnp.zeros((FC_MID,), jnp.float32),
        "fc2_w": xavier(ks[3], FC_MID + c2, FC_MID), "fc2_b": jnp.zeros((FC_MID,), jnp.float32),
        "fc3_w": xavier(ks[4], FC_MID, 1), "fc3_b": jnp.zeros((1,), jnp.float32),
    }


# ----------------------------------------------------------------------------
# Forward pass (Pallas conv path + plain-XLA head) and pure-JAX reference
# ----------------------------------------------------------------------------
def three_d_net_forward(params, x, state):
    c1, c2 = CONV_MID
    B = x.shape[0]
    hp = jax.lax.Precision.HIGHEST

    # conv2 (k=1, stride=2, pad=0) reads only every other conv1 output along each axis,
    # so the strides compose exactly: extract conv1 patches directly at stride 4.
    patches, (Do, Ho, Wo) = im2col_3d(x.astype(jnp.bfloat16), k=3, stride=4, pad=3)
    K = patches.shape[1]
    S = Do * Ho * Wo

    # When the batch can't fill both v7x TensorCores, split the spatial reduction instead.
    s_split = 2 if B == 1 else 1
    n_tiles = max(s_split, _round_up(-(-S // MAX_TILE_S), s_split))
    tile_s = _round_up(-(-S // n_tiles), 128)
    S_pad = tile_s * n_tiles
    patches = jnp.pad(patches, ((0, 0), (0, 0), (0, S_pad - S)))

    # Fold conv biases + eval-mode BatchNorm into per-channel scaled weights / shifts.
    sc1, sh1 = bn_affine(params["bn1"])
    w1_eff = (params["conv1_w"].reshape(c1, -1) * sc1[:, None]).astype(jnp.bfloat16)
    sh1_eff = (sh1 + params["conv1_b"] * sc1).reshape(c1, 1).astype(jnp.float32)
    sc2, sh2 = bn_affine(params["bn2"])
    w2_eff = (params["conv2_w"].reshape(c2, c1) * sc2[:, None]).astype(jnp.bfloat16)
    sh2_eff = (sh2 + params["conv2_b"] * sc2).reshape(c2, 1).astype(jnp.float32)

    acc = fused_conv_pool_sum(patches, w1_eff, sh1_eff, w2_eff, sh2_eff,
                              tile_s=tile_s, s_split=s_split)        # (B, s_split, c2, 1)
    acc = acc.sum(axis=1)[..., 0]                                    # (B, c2)

    # Padded (all-zero) columns each contribute relu(W2 @ relu(sh1) + sh2); subtract the
    # constant analytically instead of masking every tile in the kernel, then take the mean.
    pad_h1 = jnp.maximum(sh1_eff, 0.0).astype(jnp.bfloat16)
    pad_h2 = jnp.maximum(
        jnp.dot(w2_eff, pad_h1, preferred_element_type=jnp.float32) + sh2_eff, 0.0)
    pooled = (acc - float(S_pad - S) * pad_h2[:, 0]) * (1.0 / S)     # (B, c2)

    # FC head in plain XLA: a handful of <=80-wide matmuls; a pallas_call launch plus a
    # lane-sparse (B, 1) store would cost more than the math itself.
    # Dropout is identity (inference).
    # TODO(synk): training-mode dropout RNG not implemented.
    s = jnp.maximum(jnp.dot(state, params["fc1_w"], precision=hp) + params["fc1_b"], 0.0)
    cat = jnp.maximum(jnp.concatenate([pooled, s], axis=-1), 0.0)
    h = jnp.maximum(jnp.dot(cat, params["fc2_w"], precision=hp) + params["fc2_b"], 0.0)
    return jnp.dot(h, params["fc3_w"], precision=hp) + params["fc3_b"]


def reference_forward(params, x, state):
    """Pure-JAX f32 (HIGHEST) reference using the original two-conv formulation; it
    independently validates the stride composition, im2col, BN folding and fusion."""
    hp = jax.lax.Precision.HIGHEST
    c1, c2 = CONV_MID
    dn = ("NCDHW", "OIDHW", "NCDHW")

    y = jax.lax.conv_general_dilated(x, params["conv1_w"], window_strides=(2, 2, 2),
                                     padding=[(3, 3)] * 3, dimension_numbers=dn,
                                     precision=hp)
    y = y + params["conv1_b"].reshape(1, -1, 1, 1, 1)
    sc1, sh1 = bn_affine(params["bn1"])
    y = jnp.maximum(y * sc1.reshape(1, -1, 1, 1, 1) + sh1.reshape(1, -1, 1, 1, 1), 0.0)

    y = jax.lax.conv_general_dilated(y, params["conv2_w"], window_strides=(2, 2, 2),
                                     padding=[(0, 0)] * 3, dimension_numbers=dn,
                                     precision=hp)
    y = y + params["conv2_b"].reshape(1, -1, 1, 1, 1)
    sc2, sh2 = bn_affine(params["bn2"])
    y = jnp.maximum(y * sc2.reshape(1, -1, 1, 1, 1) + sh2.reshape(1, -1, 1, 1, 1), 0.0)

    pooled = y.mean(axis=(2, 3, 4))                                  # (B, c2)
    s = jnp.maximum(jnp.dot(state, params["fc1_w"], precision=hp) + params["fc1_b"], 0.0)
    cat = jnp.maximum(jnp.concatenate([pooled, s], axis=-1), 0.0)
    h = jnp.maximum(jnp.dot(cat, params["fc2_w"], precision=hp) + params["fc2_b"], 0.0)
    return jnp.dot(h, params["fc3_w"], precision=hp) + params["fc3_b"]


if __name__ == "__main__":
    B, Cin, D = 2, 4, 16
    state_dim = 32
    key = jax.random.PRNGKey(0)
    kx, kst, kp = jax.random.split(key, 3)
    x = jax.random.normal(kx, (B, Cin, D, D, D), jnp.float32)
    state = jax.random.normal(kst, (B, state_dim), jnp.float32)
    params = init_params(kp, Cin, state_dim)

    fwd = jax.jit(three_d_net_forward)
    out = jax.block_until_ready(fwd(params, x, state))
    assert out.shape == (B, 1)

    ref = reference_forward(params, x, state)
    # Kernel feeds both matmuls in bf16 (f32 accumulate); compare to f32-HIGHEST reference.
    np.testing.assert_allclose(np.asarray(out), np.asarray(ref), rtol=2e-2, atol=2e-2)
    print("KERNEL_OK")
</pallas_src>

<mosaic_0001>
module attributes {stable_mosaic.version = 11 : i64} {
  func.func @kernel(%arg0: i32, %arg1: i32, %arg2: i32, %arg3: memref<1x108x128xbf16, #tpu.memory_space<vmem>>, %arg4: memref<8x108xbf16, #tpu.memory_space<vmem>>, %arg5: memref<8x1xf32, #tpu.memory_space<vmem>>, %arg6: memref<16x8xbf16, #tpu.memory_space<vmem>>, %arg7: memref<16x1xf32, #tpu.memory_space<vmem>>, %arg8: memref<1x1x16x1xf32, #tpu.memory_space<vmem>>) attributes {dimension_semantics = [#tpu.dimension_semantics<parallel>, #tpu.dimension_semantics<parallel>, #tpu.dimension_semantics<arbitrary>], iteration_bounds = array<i64: 2, 1, 1>, scalar_prefetch = 0 : i64, scratch_operands = 0 : i64, tpu.core_type = #tpu.core_type<tc>, window_params = [{transform_indices = @transform_0, window_bounds = array<i64: 1, 108, 128>}, {pipeline_mode = #tpu.pipeline_mode<synchronous>, transform_indices = @transform_1, window_bounds = array<i64: 8, 108>}, {pipeline_mode = #tpu.pipeline_mode<synchronous>, transform_indices = @transform_2, window_bounds = array<i64: 8, 1>}, {pipeline_mode = #tpu.pipeline_mode<synchronous>, transform_indices = @transform_3, window_bounds = array<i64: 16, 8>}, {pipeline_mode = #tpu.pipeline_mode<synchronous>, transform_indices = @transform_4, window_bounds = array<i64: 16, 1>}, {transform_indices = @transform_5, window_bounds = array<i64: 1, 1, 16, 1>}]} {
    %c0_i32 = arith.constant 0 : i32
    %0 = arith.cmpi eq, %arg2, %c0_i32 : i32
    %1 = arith.extui %0 : i1 to i32
    %c0_i32_0 = arith.constant 0 : i32
    %2 = arith.cmpi ne, %1, %c0_i32_0 : i32
    scf.if %2 {
      %cst_23 = arith.constant 0.000000e+00 : f32
      %28 = vector.broadcast %cst_23 : f32 to vector<16x1xf32>
      %c0_24 = arith.constant 0 : index
      %c0_25 = arith.constant 0 : index
      %c0_26 = arith.constant 0 : index
      %c0_27 = arith.constant 0 : index
      %29 = vector.load %arg8[%c0_24, %c0_25, %c0_26, %c0_27] : memref<1x1x16x1xf32, #tpu.memory_space<vmem>>, vector<1x1x16x1xf32>
      %30 = vector.shape_cast %29 : vector<1x1x16x1xf32> to vector<16x1xf32>
      %31 = vector.shape_cast %28 : vector<16x1xf32> to vector<1x1x16x1xf32>
      tpu.vector_store %arg8[%c0_24, %c0_25, %c0_26, %c0_27], %31 {strides = array<i32>} : memref<1x1x16x1xf32, #tpu.memory_space<vmem>>, vector<1x1x16x1xf32>,
    } else {
    }
    %c0 = arith.constant 0 : index
    %c0_1 = arith.constant 0 : index
    %c0_2 = arith.constant 0 : index
    %3 = vector.load %arg3[%c0, %c0_1, %c0_2] : memref<1x108x128xbf16, #tpu.memory_space<vmem>>, vector<1x108x128xbf16>
    %4 = vector.shape_cast %3 : vector<1x108x128xbf16> to vector<108x128xbf16>
    %c0_3 = arith.constant 0 : index
    %c0_4 = arith.constant 0 : index
    %5 = vector.load %arg4[%c0_3, %c0_4] : memref<8x108xbf16, #tpu.memory_space<vmem>>, vector<8x108xbf16>
    %cst = arith.constant dense<0.000000e+00> : vector<8x128xf32>
    %6 = tpu.matmul %5, %4, %cst {dimension_numbers = #tpu.dot_dimension_numbers<[1], [0], [0], [1], [0, 0, 1, 1], [], []>} : vector<8x108xbf16>, vector<108x128xbf16>, vector<8x128xf32> -> vector<8x128xf32>
    %c0_5 = arith.constant 0 : index
    %c0_6 = arith.constant 0 : index
    %7 = vector.load %arg5[%c0_5, %c0_6] : memref<8x1xf32, #tpu.memory_space<vmem>>, vector<8x1xf32>
    %8 = vector.broadcast %7 : vector<8x1xf32> to vector<8x128xf32>
    %9 = arith.addf %6, %8 : vector<8x128xf32>
    %cst_7 = arith.constant 0.000000e+00 : f32
    %10 = vector.broadcast %cst_7 : f32 to vector<8x128xf32>
    %11 = arith.maximumf %9, %10 : vector<8x128xf32>
    %c0_8 = arith.constant 0 : index
    %c0_9 = arith.constant 0 : index
    %12 = vector.load %arg6[%c0_8, %c0_9] : memref<16x8xbf16, #tpu.memory_space<vmem>>, vector<16x8xbf16>
    %13 = arith.truncf %11 : vector<8x128xf32> to vector<8x128xbf16>
    %cst_10 = arith.constant dense<0.000000e+00> : vector<16x128xf32>
    %14 = tpu.matmul %12, %13, %cst_10 {dimension_numbers = #tpu.dot_dimension_numbers<[1], [0], [0], [1], [0, 0, 1, 1], [], []>} : vector<16x8xbf16>, vector<8x128xbf16>, vector<16x128xf32> -> vector<16x128xf32>
    %c0_11 = arith.constant 0 : index
    %c0_12 = arith.constant 0 : index
    %15 = vector.load %arg7[%c0_11, %c0_12] : memref<16x1xf32, #tpu.memory_space<vmem>>, vector<16x1xf32>
    %16 = vector.broadcast %15 : vector<16x1xf32> to vector<16x128xf32>
    %17 = arith.addf %14, %16 : vector<16x128xf32>
    %cst_13 = arith.constant 0.000000e+00 : f32
    %18 = vector.broadcast %cst_13 : f32 to vector<16x128xf32>
    %19 = arith.maximumf %17, %18 : vector<16x128xf32>
    %c0_14 = arith.constant 0 : index
    %c0_15 = arith.constant 0 : index
    %c0_16 = arith.constant 0 : index
    %c0_17 = arith.constant 0 : index
    %20 = vector.load %arg8[%c0_14, %c0_15, %c0_16, %c0_17] : memref<1x1x16x1xf32, #tpu.memory_space<vmem>>, vector<1x1x16x1xf32>
    %21 = vector.shape_cast %20 : vector<1x1x16x1xf32> to vector<16x1xf32>
    %cst_18 = arith.constant dense<0.000000e+00> : vector<16xf32>
    %22 = vector.multi_reduction <add>, %19, %cst_18 [1] : vector<16x128xf32> to vector<16xf32>
    %23 = vector.shape_cast %22 : vector<16xf32> to vector<16x1xf32>
    %24 = arith.addf %21, %23 : vector<16x1xf32>
    %c0_19 = arith.constant 0 : index
    %c0_20 = arith.constant 0 : index
    %c0_21 = arith.constant 0 : index
    %c0_22 = arith.constant 0 : index
    %25 = vector.load %arg8[%c0_19, %c0_20, %c0_21, %c0_22] : memref<1x1x16x1xf32, #tpu.memory_space<vmem>>, vector<1x1x16x1xf32>
    %26 = vector.shape_cast %25 : vector<1x1x16x1xf32> to vector<16x1xf32>
    %27 = vector.shape_cast %24 : vector<16x1xf32> to vector<1x1x16x1xf32>
    tpu.vector_store %arg8[%c0_19, %c0_20, %c0_21, %c0_22], %27 {strides = array<i32>} : memref<1x1x16x1xf32, #tpu.memory_space<vmem>>, vector<1x1x16x1xf32>,
    return
  }
  func.func @transform_0(%arg0: i32, %arg1: i32, %arg2: i32) -> (i32, i32, i32) {
    %c1_i32 = arith.constant 1 : i32
    %0 = arith.muli %arg1, %c1_i32 : i32
    %1 = arith.addi %0, %arg2 : i32
    %c0_i32 = arith.constant 0 : i32
    %c0_i32_0 = arith.constant 0 : i32
    return %arg0, %c0_i32, %1 : i32, i32, i32
  }
  func.func @transform_1(%arg0: i32, %arg1: i32, %arg2: i32) -> (i32, i32) {
    %c0_i32 = arith.constant 0 : i32
    %c0_i32_0 = arith.constant 0 : i32
    %c0_i32_1 = arith.constant 0 : i32
    return %c0_i32, %c0_i32_0 : i32, i32
  }
  func.func @transform_2(%arg0: i32, %arg1: i32, %arg2: i32) -> (i32, i32) {
    %c0_i32 = arith.constant 0 : i32
    %c0_i32_0 = arith.constant 0 : i32
    %c0_i32_1 = arith.constant 0 : i32
    return %c0_i32, %c0_i32_0 : i32, i32
  }
  func.func @transform_3(%arg0: i32, %arg1: i32, %arg2: i32) -> (i32, i32) {
    %c0_i32 = arith.constant 0 : i32
    %c0_i32_0 = arith.constant 0 : i32
    %c0_i32_1 = arith.constant 0 : i32
    return %c0_i32, %c0_i32_0 : i32, i32
  }
  func.func @transform_4(%arg0: i32, %arg1: i32, %arg2: i32) -> (i32, i32) {
    %c0_i32 = arith.constant 0 : i32
    %c0_i32_0 = arith.constant 0 : i32
    %c0_i32_1 = arith.constant 0 : i32
    return %c0_i32, %c0_i32_0 : i32, i32
  }
  func.func @transform_5(%arg0: i32, %arg1: i32, %arg2: i32) -> (i32, i32, i32, i32) {
    %c0_i32 = arith.constant 0 : i32
    %c0_i32_0 = arith.constant 0 : i32
    %c0_i32_1 = arith.constant 0 : i32
    return %arg0, %arg1, %c0_i32, %c0_i32_0 : i32, i32, i32, i32
  }
}

</mosaic_0001>

<llo_original>
// kernel: three_d_net_forward.1
$region0: #{three_d_net_forward.1}
  #allocation0 [shape = 'u32[]', space=smem, size = 0x4, offset = 0x4, fixed_abs, tag = 'smem constant byte address 0x4 - core index']
  #allocation1 [shape = 'u32[144,128]{1,0:T(1,128)}', space=vmem, size = 0x12000, scoped, tag = 'internal scratch']
  %s0 = inlined_call_operand.vmem [shape: bf16[2,108,128], index: 0, kind: input, shape index: {}]
  %s1 = inlined_call_operand.vmem [shape: bf16[8,108], index: 1, kind: input, shape index: {}]
  %s2 = inlined_call_operand.vmem [shape: f32[8,1], index: 2, kind: input, shape index: {}]
  %s3 = inlined_call_operand.vmem [shape: bf16[16,8], index: 3, kind: input, shape index: {}]
  %s4 = inlined_call_operand.vmem [shape: f32[16,1], index: 4, kind: input, shape index: {}]
  %s5 = inlined_call_operand.vmem [shape: f32[2,1,16,1], index: 5, kind: output, shape index: {}]
  %s6 = sld [smem:[#allocation0]]
  $region57: #{three_d_net_forward.1} parent=0
    _
  %s8 = ssub.s32 1, %s6
  %s9 = scalar_select 0, %s8, %s6
  loop: start=0, step=1, limit=4
  $region2: #{three_d_net_forward.1} parent=0 // loop_pre_header
    _
  $region3: #{three_d_net_forward.1} parent=0 // loop_header
    %s11 = sphi 0, %s15
    %p12 = scmp.ge.s32.totalorder %s11, 4
    %s18 = sphi 0, %s37
    %s19 = sphi 0, %s33
    %s20 = sphi 0, %s29
    %s21 = sphi 0, %s18
    %s22 = sphi 0, %s19
    %s23 = sphi 0, %s20
    %s24 = sphi 0, %s21
    %s25 = sphi 0, %s22
    %s26 = sphi 0, %s23
    %s44 = sphi 0, %s46
    %s47 = sphi 0, %s44
    %s48 = sphi 0, %s47
    %s64 = sphi 0, %s48
    %s68 = sphi 0, %s68
    %s70 = sphi 0, %s68
    %s71 = sphi 0, %s70
    %s85 = sphi 0, %s71
    %s89 = sphi 0, %s89
    %s91 = sphi 0, %s89
    %s92 = sphi 0, %s91
    %s106 = sphi 0, %s92
    %s110 = sphi 0, %s110
    %s112 = sphi 0, %s110
    %s113 = sphi 0, %s112
    %s127 = sphi 0, %s113
    %s131 = sphi 0, %s131
    %s133 = sphi 0, %s131
    %s134 = sphi 0, %s133
    %s148 = sphi 0, %s134
    %s156 = sphi 0, %s158
    %s159 = sphi 0, %s156
    %s160 = sphi 0, %s159
    %s176 = sphi 0, %s160
  $region4: #{three_d_net_forward.1} parent=0 // loop_header_branch
    %14 = sbr.rel (%p12) target = $region8
  $region5: #{three_d_net_forward.1} parent=0 // loop_body
    %s16 = ssub.s32 %s11, 1
    %s17 = ssub.s32 %s11, 2
    %s27 = sadd.s32 1, %s20
    %p28 = scmp.ge.s32.totalorder %s27, 1
    %s29 = scalar_select %p28, 0, %s27
    %s30 = sadd.s32 1, %s19
    %s31 = scalar_select %p28, %s30, %s19
    %p32 = scmp.ge.s32.totalorder %s31, 1
    %s33 = scalar_select %p32, 0, %s31
    %s34 = sadd.s32 1, %s18
    %s35 = scalar_select %p32, %s34, %s18
    %p36 = scmp.ge.s32.totalorder %s35, 2
    %s37 = scalar_select %p36, 0, %s35
    %s38 = sadd.s32 %s19, %s20
    %s39 = sadd.s32 %s33, %s29
    %s40 = ssub.s32 %s18, %s37
    %s41 = ssub.s32 %s38, %s39
    %s42 = sor.u32 %s40, %s41
    %p43 = scmp.eq.s32.totalorder %s42, 0
    %s45 = sadd.s32 %s44, 1
    %s46 = scalar_select %p43, %s44, %s45
    %p49 = pneg %p43
    %p50 = scmp.eq.s32.totalorder %s11, 1
    %p51 = por %p49, %p50
    %p52 = scmp.ne.s32.totalorder %s44, %s47
    %p53 = scmp.eq.s32.totalorder %s11, 0
    %p54 = por %p52, %p53
    %p55 = scmp.ne.s32.totalorder %s44, %s47
    %p56 = scmp.eq.s32.totalorder %s16, 1
    %p57 = por %p55, %p56
    %p58 = scmp.ne.s32.totalorder %s47, %s48
    %p59 = scmp.eq.s32.totalorder %s16, 0
    %p60 = por %p58, %p59
    %p61 = scmp.ne.s32.totalorder %s47, %s48
    %p62 = scmp.eq.s32.totalorder %s17, 1
    %p63 = por %p61, %p62
    %p65 = scmp.ne.s32.totalorder %s48, %s64
    %p66 = scmp.eq.s32.totalorder %s17, 0
    %p67 = por %p65, %p66
    %s69 = sadd.s32 %s68, 1
    %p72 = scmp.eq.s32.totalorder %s11, 1
    %p73 = scmp.ne.s32.totalorder %s68, %s70
    %p74 = scmp.eq.s32.totalorder %s11, 0
    %p75 = por %p73, %p74
    %p76 = scmp.ne.s32.totalorder %s68, %s70
    %p77 = scmp.eq.s32.totalorder %s16, 1
    %p78 = por %p76, %p77
    %p79 = scmp.ne.s32.totalorder %s70, %s71
    %p80 = scmp.eq.s32.totalorder %s16, 0
    %p81 = por %p79, %p80
    %p82 = scmp.ne.s32.totalorder %s70, %s71
    %p83 = scmp.eq.s32.totalorder %s17, 1
    %p84 = por %p82, %p83
    %p86 = scmp.ne.s32.totalorder %s71, %s85
    %p87 = scmp.eq.s32.totalorder %s17, 0
    %p88 = por %p86, %p87
    %s90 = sadd.s32 %s89, 1
    %p93 = scmp.eq.s32.totalorder %s11, 1
    %p94 = scmp.ne.s32.totalorder %s89, %s91
    %p95 = scmp.eq.s32.totalorder %s11, 0
    %p96 = por %p94, %p95
    %p97 = scmp.ne.s32.totalorder %s89, %s91
    %p98 = scmp.eq.s32.totalorder %s16, 1
    %p99 = por %p97, %p98
    %p100 = scmp.ne.s32.totalorder %s91, %s92
    %p101 = scmp.eq.s32.totalorder %s16, 0
    %p102 = por %p100, %p101
    %p103 = scmp.ne.s32.totalorder %s91, %s92
    %p104 = scmp.eq.s32.totalorder %s17, 1
    %p105 = por %p103, %p104
    %p107 = scmp.ne.s32.totalorder %s92, %s106
    %p108 = scmp.eq.s32.totalorder %s17, 0
    %p109 = por %p107, %p108
    %s111 = sadd.s32 %s110, 1
    %p114 = scmp.eq.s32.totalorder %s11, 1
    %p115 = scmp.ne.s32.totalorder %s110, %s112
    %p116 = scmp.eq.s32.totalorder %s11, 0
    %p117 = por %p115, %p116
    %p118 = scmp.ne.s32.totalorder %s110, %s112
    %p119 = scmp.eq.s32.totalorder %s16, 1
    %p120 = por %p118, %p119
    %p121 = scmp.ne.s32.totalorder %s112, %s113
    %p122 = scmp.eq.s32.totalorder %s16, 0
    %p123 = por %p121, %p122
    %p124 = scmp.ne.s32.totalorder %s112, %s113
    %p125 = scmp.eq.s32.totalorder %s17, 1
    %p126 = por %p124, %p125
    %p128 = scmp.ne.s32.totalorder %s113, %s127
    %p129 = scmp.eq.s32.totalorder %s17, 0
    %p130 = por %p128, %p129
    %s132 = sadd.s32 %s131, 1
    %p135 = scmp.eq.s32.totalorder %s11, 1
    %p136 = scmp.ne.s32.totalorder %s131, %s133
    %p137 = scmp.eq.s32.totalorder %s11, 0
    %p138 = por %p136, %p137
    %p139 = scmp.ne.s32.totalorder %s131, %s133
    %p140 = scmp.eq.s32.totalorder %s16, 1
    %p141 = por %p139, %p140
    %p142 = scmp.ne.s32.totalorder %s133, %s134
    %p143 = scmp.eq.s32.totalorder %s16, 0
    %p144 = por %p142, %p143
    %p145 = scmp.ne.s32.totalorder %s133, %s134
    %p146 = scmp.eq.s32.totalorder %s17, 1
    %p147 = por %p145, %p146
    %p149 = scmp.ne.s32.totalorder %s134, %s148
    %p150 = scmp.eq.s32.totalorder %s17, 0
    %p151 = por %p149, %p150
    %s152 = ssub.s32 %s18, %s37
    %s153 = ssub.s32 %s19, %s33
    %s154 = sor.u32 %s152, %s153
    %p155 = scmp.eq.s32.totalorder %s154, 0
    %s157 = sadd.s32 %s156, 1
    %s158 = scalar_select %p155, %s156, %s157
    %p161 = pneg %p155
    %p162 = scmp.eq.s32.totalorder %s11, 1
    %p163 = por %p161, %p162
    %p164 = scmp.ne.s32.totalorder %s156, %s159
    %p165 = scmp.eq.s32.totalorder %s11, 0
    %p166 = por %p164, %p165
    %p167 = scmp.ne.s32.totalorder %s156, %s159
    %p168 = scmp.eq.s32.totalorder %s16, 1
    %p169 = por %p167, %p168
    %p170 = scmp.ne.s32.totalorder %s159, %s160
    %p171 = scmp.eq.s32.totalorder %s16, 0
    %p172 = por %p170, %p171
    %p173 = scmp.ne.s32.totalorder %s159, %s160
    %p174 = scmp.eq.s32.totalorder %s17, 1
    %p175 = por %p173, %p174
    %p177 = scmp.ne.s32.totalorder %s160, %s176
    %p178 = scmp.eq.s32.totalorder %s17, 0
    %p179 = por %p177, %p178
    %p180 = scmp.le.s32.totalorder 1, %s11
    %p181 = scmp.lt.s32.totalorder %s11, 3
    %p182 = pnand %p180, %p181
    %p183 = pneg %p182
    // Predicated region
    $region9: #{three_d_net_forward.1} parent=5 // pred_check
      _
    $region10: #{three_d_net_forward.1} parent=5 // pred_check_branch
      %185 = sbr.rel (%p182) target = $region12
    $region11: #{three_d_net_forward.1} parent=5 // pred_region
      %s186 = ssub.s32 %s11, 1
      // Predicated region
      $region13: #{three_d_net_forward.1} parent=11 // pred_check
        %p187 = pneg %p81
      $region14: #{three_d_net_forward.1} parent=11 // pred_check_branch
        %189 = sbr.rel (%p187) target = $region16
      $region15: #{three_d_net_forward.1} parent=11 // pred_region
        _
      $region16: #{three_d_net_forward.1} parent=11 // pred_fallthru
        _
      // Predicated region
      $region17: #{three_d_net_forward.1} parent=11 // pred_check
        %p190 = pneg %p102
      $region18: #{three_d_net_forward.1} parent=11 // pred_check_branch
        %192 = sbr.rel (%p190) target = $region20
      $region19: #{three_d_net_forward.1} parent=11 // pred_region
        _
      $region20: #{three_d_net_forward.1} parent=11 // pred_fallthru
        _
      // Predicated region
      $region21: #{three_d_net_forward.1} parent=11 // pred_check
        %p193 = pneg %p123
      $region22: #{three_d_net_forward.1} parent=11 // pred_check_branch
        %195 = sbr.rel (%p193) target = $region24
      $region23: #{three_d_net_forward.1} parent=11 // pred_region
        _
      $region24: #{three_d_net_forward.1} parent=11 // pred_fallthru
        _
      // Predicated region
      $region25: #{three_d_net_forward.1} parent=11 // pred_check
        %p196 = pneg %p144
      $region26: #{three_d_net_forward.1} parent=11 // pred_check_branch
        %198 = sbr.rel (%p196) target = $region28
      $region27: #{three_d_net_forward.1} parent=11 // pred_region
        _
      $region28: #{three_d_net_forward.1} parent=11 // pred_fallthru
        _
    $region12: #{three_d_net_forward.1} parent=5 // pred_fallthru
      _
    %p199 = scmp.lt.s32.totalorder %s11, 2
    // Predicated region
    $region29: #{three_d_net_forward.1} parent=5 // pred_check
      %p200 = pneg %p199
    $region30: #{three_d_net_forward.1} parent=5 // pred_check_branch
      %202 = sbr.rel (%p200) target = $region32
    $region31: #{three_d_net_forward.1} parent=5 // pred_region
      // Predicated region
      $region33: #{three_d_net_forward.1} parent=31 // pred_check
        %p203 = pneg %p54
      $region34: #{three_d_net_forward.1} parent=31 // pred_check_branch
        %205 = sbr.rel (%p203) target = $region36
      $region35: #{three_d_net_forward.1} parent=31 // pred_region
        %s206 = sadd.s32 %s19, %s20
        %p207 = scmp.lt.s32.totalorder %s18, 1
        %s208 = scalar_select %p207, %s18, 1
        %p209 = scmp.lt.s32.totalorder %s206, 0
        %s210 = scalar_select %p209, %s206, 0
        %s211 = smul.addr %s208, 14
        %s212 = sadd.s32 %s210, %s211
        %s213 = smul.addr %s212, 4
        %s214 = scalar_lea.vmem %s0, %s213
        %s215 = sadd.s32 %s19, %s20
      $region36: #{three_d_net_forward.1} parent=31 // pred_fallthru
        _
    $region32: #{three_d_net_forward.1} parent=5 // pred_fallthru
      _
    %p216 = scmp.le.s32.totalorder 1, %s11
    %p217 = scmp.lt.s32.totalorder %s11, 3
    %p218 = pnand %p216, %p217
    %p219 = pneg %p218
    // Predicated region
    $region37: #{three_d_net_forward.1} parent=5 // pred_check
      _
    $region38: #{three_d_net_forward.1} parent=5 // pred_check_branch
      %221 = sbr.rel (%p218) target = $region40
    $region39: #{three_d_net_forward.1} parent=5 // pred_region
      %s222 = ssub.s32 %s11, 1
      %s223 = sadd.s32 %s22, %s23
      %p224 = scmp.lt.s32.totalorder %s21, 1
      %s225 = scalar_select %p224, %s21, 1
      %p226 = scmp.lt.s32.totalorder %s223, 0
      %s227 = scalar_select %p226, %s223, 0
      %s228 = smul.addr %s225, 14
      %s229 = sadd.s32 %s227, %s228
      %s230 = smul.addr %s229, 4
      %s231 = scalar_lea.vmem %s0, %s230
      %p232 = pneg %p60
      %p233 = pneg %p57
      %p234 = pneg %p81
      %p235 = pneg %p78
      %p236 = pneg %p102
      %p237 = pneg %p99
      %p238 = pneg %p123
      %p239 = pneg %p120
      %p240 = pneg %p144
      %p241 = pneg %p141
      %p242 = pneg %p172
      %p243 = pneg %p169
      %p244 = scmp.lt.s32.totalorder %s21, 1
      %s245 = scalar_select %p244, %s21, 1
      %p246 = scmp.lt.s32.totalorder %s22, 0
      %s247 = scalar_select %p246, %s22, 0
      %s248 = smul.addr %s247, 2
      %s249 = smul.addr %s245, 2
      %s250 = sadd.s32 %s248, %s249
      %s251 = smul.addr %s250, 8
      %s252 = scalar_lea.vmem %s5, %s251
      %s253 = sadd.s32 %s22, %s23
      %p254 = scmp.lt.s32.totalorder %s21, 1
      %s255 = scalar_select %p254, %s21, 1
      %p256 = scmp.lt.s32.totalorder %s253, 0
      %s257 = scalar_select %p256, %s253, 0
      %s258 = smul.addr %s255, 14
      %s259 = sadd.s32 %s257, %s258
      %s260 = smul.addr %s259, 4
      %s261 = scalar_lea.vmem %s0, %s260
      %s262 = sadd.s32 %s22, %s23
      %p263 = scmp.lt.s32.totalorder %s21, 1
      %s264 = scalar_select %p263, %s21, 1
      %p265 = scmp.lt.s32.totalorder %s22, 0
      %s266 = scalar_select %p265, %s22, 0
      %s267 = smul.addr %s266, 2
      %s268 = smul.addr %s264, 2
      %s269 = sadd.s32 %s267, %s268
      %s270 = smul.addr %s269, 8
      %s271 = scalar_lea.vmem %s5, %s270
      %p273 = scmp.eq.s32.totalorder %s23, 0
      // Predicated region
      $region41: #{three_d_net_forward.1} parent=39 // pred_check
        %p274 = pneg %p273
      $region42: #{three_d_net_forward.1} parent=39 // pred_check_branch
        %276 = sbr.rel (%p274) target = $region44
      $region43: #{three_d_net_forward.1} parent=39 // pred_region
        %vm277 = vcmask 7168
        %278 = vst.msk [vmem:[%s271] sm:$0xff] %vm277, 0.0
        %279 = vst.msk [vmem:[%s271 + $0x8] sm:$0xff] %vm277, 0.0
      $region44: #{three_d_net_forward.1} parent=39 // pred_fallthru
        _
      %v280 = vld [vmem:[%s261] sm:$0xf]
      %v281 = vld [vmem:[%s261 + $0x4] sm:$0xf]
      %v282 = vld [vmem:[%s261 + $0x8] sm:$0xf]
      %v283 = vld [vmem:[%s261 + $0xc] sm:$0xf]
      %v284 = vld [vmem:[%s261 + $0x10] sm:$0xf]
      %v285 = vld [vmem:[%s261 + $0x14] sm:$0xf]
      %v286 = vld [vmem:[%s261 + $0x18] sm:$0xf]
      %v287 = vld [vmem:[%s261 + $0x1c] sm:$0xf]
      %v288 = vld [vmem:[%s261 + $0x20] sm:$0xf]
      %v289 = vld [vmem:[%s261 + $0x24] sm:$0xf]
      %v290 = vld [vmem:[%s261 + $0x28] sm:$0xf]
      %v291 = vld [vmem:[%s261 + $0x2c] sm:$0xf]
      %v292 = vld [vmem:[%s261 + $0x30] sm:$0xf]
      %v293 = vld [vmem:[%s261 + $0x34] sm:$0x3]
      %v294 = vld [vmem:[%s1] sm:$0xf]
      %v295 = vld [vmem:[%s2] sm:$0xff]
      %297 = vset.pattern.permute.xlu0 0
      %298 = vperm.xlu0 %297, %v295
      %v299 = vpop.permute.xlu0 %298
      %v315 = vunpack.c.l.b16 %v280
      %v316 = vunpack.c.l.b16 %v281
      %v317 = vunpack.c.l.b16 %v282
      %v318 = vunpack.c.l.b16 %v283
      %v319 = vunpack.c.l.b16 %v284
      %v320 = vunpack.c.l.b16 %v285
      %v321 = vunpack.c.l.b16 %v286
      %v322 = vunpack.c.l.b16 %v287
      %v323 = vunpack.c.l.b16 %v288
      %v324 = vunpack.c.l.b16 %v289
      %v325 = vunpack.c.l.b16 %v290
      %v326 = vunpack.c.l.b16 %v291
      %v327 = vunpack.c.l.b16 %v292
      %v328 = vunpack.c.l.b16 %v293
      %v329 = vpack.c.b16 %v316, %v315
      %v330 = vpack.c.b16 %v318, %v317
      %v331 = vpack.c.b16 %v320, %v319
      %v332 = vpack.c.b16 %v322, %v321
      %v333 = vpack.c.b16 %v324, %v323
      %v334 = vpack.c.b16 %v326, %v325
      %v335 = vpack.c.b16 %v328, %v327
      %vm342 = vcmask 883712
      %v344 = vsel %vm342, %v294, 0
      %vm346 = vcmask 1045504
      %v348 = vsel %vm346, %v335, 0
      %350 = vmatprep.subr.bf16.mxu0 0
      %351 = vmatpush1.bf16.msra.mxu0 %v329
      %352 = vmatprep.subr.bf16.mxu0 0
      %353 = vmatpush1.bf16.msra.mxu0 %v330
      %354 = vmatprep.subr.bf16.mxu0 0
      %355 = vmatpush1.bf16.msra.mxu0 %v331
      %356 = vmatprep.subr.bf16.mxu0 0
      %357 = vmatpush1.bf16.msra.mxu0 %v332
      %358 = vmatprep.subr.bf16.mxu0 0
      %359 = vmatpush1.bf16.msra.mxu0 %v333
      %360 = vmatprep.subr.bf16.mxu0 0
      %361 = vmatpush1.bf16.msra.mxu0 %v334
      %362 = vmatprep.subr.bf16.mxu0 0
      %363 = vmatpush1.bf16.msra.mxu0 %v348
      %364 = vmatprep.subr.bf16.mxu0 0
      %365 = vmatpush1.bf16.msra.mxu0 0
      %366 = vmatprep.subr.bf16.mxu0 0
      %367 = vmatpush1.bf16.msra.mxu0 0
      %368 = vmatprep.subr.bf16.mxu0 0
      %369 = vmatpush1.bf16.msra.mxu0 0
      %370 = vmatprep.subr.bf16.mxu0 0
      %371 = vmatpush1.bf16.msra.mxu0 0
      %372 = vmatprep.subr.bf16.mxu0 0
      %373 = vmatpush1.bf16.msra.mxu0 0
      %374 = vmatprep.subr.bf16.mxu0 0
      %375 = vmatpush1.bf16.msra.mxu0 0
      %376 = vmatprep.subr.bf16.mxu0 0
      %377 = vmatpush1.bf16.msra.mxu0 0
      %378 = vmatprep.subr.bf16.mxu0 0
      %379 = vmatpush1.bf16.msra.mxu0 0
      %380 = vmatprep.subr.bf16.mxu0 0
      %381 = vmatpush1.bf16.msra.mxu0 0
      %382 = vmatprep.mubr.bf16.mxu0 0
      %383 = vmatmul.mubr.bf16.gmra.mrb[0].mxu0 %v344
      %v384 = vpop.f32.mrb[0].mxu0
      %v385 = vadd.f32 %v299, %v384
      %v386 = vpop.f32.mrb[0].mxu0
      %v387 = vpop.f32.mrb[0].mxu0
      %v388 = vpop.f32.mrb[0].mxu0
      %389 = vdwg.mxu0
      %v390 = vmax.f32 %v385, 0.0
      %v391 = vld [vmem:[%s3] sm:$0xf]
      %v392 = vld [vmem:[%s3 + $0x4] sm:$0xf]
      %v393 = vpack.c.bf16 %v390, %v390
      %v394 = vld [vmem:[%s4] sm:$0xff]
      %v395 = vld [vmem:[%s4 + $0x8] sm:$0xff]
      %397 = vset.pattern.permute.xlu0 0
      %398 = vperm.xlu0 %397, %v394
      %v399 = vpop.permute.xlu0 %398
      %402 = vset.pattern.permute.xlu0 0
      %403 = vperm.xlu0 %402, %v395
      %v404 = vpop.permute.xlu0 %403
      %v408 = vunpack.c.l.b16 %v391
      %v409 = vunpack.c.l.b16 %v392
      %v410 = vpack.c.b16 %v409, %v408
      %vm411 = vcmask 64512
      %v413 = vsel %vm411, %v410, 0
      %vm415 = vcmask 1043456
      %v417 = vsel %vm415, %v393, 0
      %419 = vmatprep.subr.bf16.mxu0 0
      %420 = vmatpush1.bf16.msra.mxu0 %v417
      %421 = vmatprep.subr.bf16.mxu0 0
      %422 = vmatpush1.bf16.msra.mxu0 0
      %423 = vmatprep.subr.bf16.mxu0 0
      %424 = vmatpush1.bf16.msra.mxu0 0
      %425 = vmatprep.subr.bf16.mxu0 0
      %426 = vmatpush1.bf16.msra.mxu0 0
      %427 = vmatprep.subr.bf16.mxu0 0
      %428 = vmatpush1.bf16.msra.mxu0 0
      %429 = vmatprep.subr.bf16.mxu0 0
      %430 = vmatpush1.bf16.msra.mxu0 0
      %431 = vmatprep.subr.bf16.mxu0 0
      %432 = vmatpush1.bf16.msra.mxu0 0
      %433 = vmatprep.subr.bf16.mxu0 0
      %434 = vmatpush1.bf16.msra.mxu0 0
      %435 = vmatprep.subr.bf16.mxu0 0
      %436 = vmatpush1.bf16.msra.mxu0 0
      %437 = vmatprep.subr.bf16.mxu0 0
      %438 = vmatpush1.bf16.msra.mxu0 0
      %439 = vmatprep.subr.bf16.mxu0 0
      %440 = vmatpush1.bf16.msra.mxu0 0
      %441 = vmatprep.subr.bf16.mxu0 0
      %442 = vmatpush1.bf16.msra.mxu0 0
      %443 = vmatprep.subr.bf16.mxu0 0
      %444 = vmatpush1.bf16.msra.mxu0 0
      %445 = vmatprep.subr.bf16.mxu0 0
      %446 = vmatpush1.bf16.msra.mxu0 0
      %447 = vmatprep.subr.bf16.mxu0 0
      %448 = vmatpush1.bf16.msra.mxu0 0
      %449 = vmatprep.subr.bf16.mxu0 0
      %450 = vmatpush1.bf16.msra.mxu0 0
      %451 = vmatprep.mubr.bf16.mxu0 0
      %452 = vmatmul.mubr.bf16.gmra.mrb[0].mxu0 %v413
      %v453 = vpop.f32.mrb[0].mxu0
      %v454 = vadd.f32 %v399, %v453
      %v455 = vpop.f32.mrb[0].mxu0
      %v456 = vpop.f32.mrb[0].mxu0
      %v457 = vadd.f32 %v404, %v456
      %v458 = vpop.f32.mrb[0].mxu0
      %459 = vdwg.mxu0
      %v460 = vmax.f32 %v454, 0.0
      %v461 = vmax.f32 %v457, 0.0
      %v462 = vld [vmem:[%s271] sm:$0xff]
      %v463 = vld [vmem:[%s271 + $0x8] sm:$0xff]
      %464 = vadd.xlane.f32.xlu0 %v460
      %v465 = vpop.xlane.xlu0 %464
      %466 = vadd.xlane.f32.xlu0 %v461
      %v467 = vpop.xlane.xlu0 %466
      %v468 = vadd.f32 %v462, %v465
      %v469 = vadd.f32 %v463, %v467
      %vm470 = vcmask 7168
      %471 = vst.msk [vmem:[%s271] sm:$0xff] %vm470, %v468
      %472 = vst.msk [vmem:[%s271 + $0x8] sm:$0xff] %vm470, %v469
      %p473 = scmp.lt.s32.totalorder %s21, 1
      %s474 = scalar_select %p473, %s21, 1
      %p475 = scmp.lt.s32.totalorder %s22, 0
      %s476 = scalar_select %p475, %s22, 0
      %s477 = smul.addr %s476, 2
      %s478 = smul.addr %s474, 2
      %s479 = sadd.s32 %s477, %s478
      %s480 = smul.addr %s479, 8
      %s481 = scalar_lea.vmem %s5, %s480
      // Predicated region
      $region45: #{three_d_net_forward.1} parent=39 // pred_check
        %p482 = pneg %p169
      $region46: #{three_d_net_forward.1} parent=39 // pred_check_branch
        %484 = sbr.rel (%p482) target = $region48
      $region47: #{three_d_net_forward.1} parent=39 // pred_region
        _
      $region48: #{three_d_net_forward.1} parent=39 // pred_fallthru
        _
    $region40: #{three_d_net_forward.1} parent=5 // pred_fallthru
      _
    %p485 = scmp.le.s32.totalorder 2, %s11
    // Predicated region
    $region49: #{three_d_net_forward.1} parent=5 // pred_check
      %p486 = pneg %p485
    $region50: #{three_d_net_forward.1} parent=5 // pred_check_branch
      %488 = sbr.rel (%p486) target = $region52
    $region51: #{three_d_net_forward.1} parent=5 // pred_region
      %s489 = ssub.s32 %s11, 2
      // Predicated region
      $region53: #{three_d_net_forward.1} parent=51 // pred_check
        %p490 = pneg %p175
      $region54: #{three_d_net_forward.1} parent=51 // pred_check_branch
        %492 = sbr.rel (%p490) target = $region56
      $region55: #{three_d_net_forward.1} parent=51 // pred_region
        %p493 = scmp.lt.s32.totalorder %s24, 1
        %s494 = scalar_select %p493, %s24, 1
        %p495 = scmp.lt.s32.totalorder %s25, 0
        %s496 = scalar_select %p495, %s25, 0
        %s497 = smul.addr %s496, 2
        %s498 = smul.addr %s494, 2
        %s499 = sadd.s32 %s497, %s498
        %s500 = smul.addr %s499, 8
        %s501 = scalar_lea.vmem %s5, %s500
      $region56: #{three_d_net_forward.1} parent=51 // pred_fallthru
        _
    $region52: #{three_d_net_forward.1} parent=5 // pred_fallthru
      _
  $region6: #{three_d_net_forward.1} parent=0 // loop_footer
    %s15 = sadd.s32 1, %s11
  $region7: #{three_d_net_forward.1} parent=0 // loop_footer_branch
    %10 = sbr.rel target = $region3
  $region8: #{three_d_net_forward.1} parent=0 // loop_exit
    _

</llo_original>
